<compile_context>
chip_gen: v7x
topology: tpu7x:2x2x1
jax: 0.10.0
libtpu: 0.0.40
codegen_flags: <defaults>
</compile_context>

<pallas_src>
import math

import jax
import jax.numpy as jnp
from jax.experimental import pallas as pl
from jax.experimental.pallas import tpu as pltpu


def _soft_attention_kernel(w_ref, x_ref, o_ref):
    # w_ref: (1, LW)   lane-folded attention weights (resident block)
    # x_ref: (TM, LW)  tile of the lane-folded input slab
    x = x_ref[...].astype(jnp.float32)
    w = w_ref[...].astype(jnp.float32)
    o_ref[...] = (jnp.tanh(w * x) * x).astype(o_ref.dtype)


def _cdiv(a, b):
    return -(-a // b)


def _round_up(a, b):
    return _cdiv(a, b) * b


def soft_attention(data, W, *, target_lane_width=1024, target_block_bytes=4 << 20):
    """Pallas TPU implementation of SoftAttentionModule.forward: tanh(W*x)*x."""
    orig_shape = data.shape
    H = orig_shape[-1]
    assert W.shape == (H,)
    dtype = data.dtype
    itemsize = jnp.dtype(dtype).itemsize
    total = int(data.size)

    # ---- lane width: multiple of H (correct broadcast) and of 128 (lane-dense) ----
    base = (H * 128) // math.gcd(H, 128)  # lcm(H, 128)
    if base > 4096:
        lane_w = H  # pathological H: fall back to plain layout (block last dim == full dim)
    else:
        k = max(1, min(target_lane_width // base, max(1, total // base)))
        lane_w = base * k
    fold = lane_w // H

    # ---- row tile: aim for a few-MiB block, multiple of 8 sublanes ----
    rows_needed = max(1, _cdiv(total, lane_w))
    row_tile = target_block_bytes // (lane_w * itemsize)
    row_tile = max(8, min(1024, (row_tile // 8) * 8))
    row_tile = min(row_tile, _round_up(rows_needed, 8))
    # Megacore: prefer >=2 balanced parallel blocks when there is enough data.
    if _cdiv(rows_needed, row_tile) == 1 and rows_needed >= 16:
        row_tile = max(8, _round_up(_cdiv(rows_needed, 2), 8))

    # ---- pad flat data to a whole number of blocks (pad rows compute to 0, sliced off) ----
    rows_padded = _round_up(rows_needed, row_tile)
    padded_total = rows_padded * lane_w
    flat = data.reshape(-1)
    if padded_total != total:
        flat = jnp.pad(flat, (0, padded_total - total))
    x2d = flat.reshape(rows_padded, lane_w)
    w2d = jnp.tile(W, fold).reshape(1, lane_w)

    grid = (rows_padded // row_tile,)

    out2d = pl.pallas_call(
        _soft_attention_kernel,
        out_shape=jax.ShapeDtypeStruct((rows_padded, lane_w), dtype),
        grid_spec=pltpu.PrefetchScalarGridSpec(
            num_scalar_prefetch=0,
            grid=grid,
            in_specs=[
                pl.BlockSpec((1, lane_w), lambda i: (0, 0)),         # W: resident block
                pl.BlockSpec((row_tile, lane_w), lambda i: (i, 0)),  # x tile
            ],
            out_specs=pl.BlockSpec((row_tile, lane_w), lambda i: (i, 0)),
        ),
        compiler_params=pltpu.CompilerParams(
            dimension_semantics=("parallel",),
        ),
    )(w2d, x2d)

    return out2d.reshape(-1)[:total].reshape(orig_shape)


if __name__ == "__main__":
    # Module: SoftAttentionModule(input_dim=32) -> W initialized to torch.ones(32)
    batch, seq, hidden = 2, 8, 32

    key = jax.random.PRNGKey(0)
    data = jax.random.normal(key, (batch, seq, hidden), dtype=jnp.float32)
    W = jnp.ones((hidden,), dtype=jnp.float32)  # exactly as in __init__

    out = soft_attention(data, W)
    out = jax.block_until_ready(out)

    ref = jnp.tanh(W * data) * data
    assert out.shape == data.shape
    assert jnp.allclose(out, ref, atol=1e-6, rtol=1e-6)

    # Secondary check: multi-block / lane-folded path with a non-trivial W
    # (validates that the W tiling + row folding preserves the broadcast).
    k1, k2 = jax.random.split(jax.random.PRNGKey(0))
    data2 = jax.random.normal(k1, (64, 128, hidden), dtype=jnp.float32)
    W2 = jax.random.normal(k2, (hidden,), dtype=jnp.float32)
    out2 = jax.block_until_ready(soft_attention(data2, W2))
    ref2 = jnp.tanh(W2 * data2) * data2
    assert jnp.allclose(out2, ref2, atol=1e-6, rtol=1e-6)

    print("KERNEL_OK")
</pallas_src>

<mosaic_0001>
module attributes {stable_mosaic.version = 11 : i64} {
  func.func @_soft_attention_kernel(%arg0: i32, %arg1: memref<1x512xf32, #tpu.memory_space<vmem>>, %arg2: memref<8x512xf32, #tpu.memory_space<vmem>>, %arg3: memref<8x512xf32, #tpu.memory_space<vmem>>) attributes {dimension_semantics = [#tpu.dimension_semantics<parallel>], iteration_bounds = array<i64: 1>, scalar_prefetch = 0 : i64, scratch_operands = 0 : i64, tpu.core_type = #tpu.core_type<tc>, window_params = [{pipeline_mode = #tpu.pipeline_mode<synchronous>, transform_indices = @transform_0, window_bounds = array<i64: 1, 512>}, {transform_indices = @transform_1, window_bounds = array<i64: 8, 512>}, {transform_indices = @transform_2, window_bounds = array<i64: 8, 512>}]} {
    %c0 = arith.constant 0 : index
    %c0_0 = arith.constant 0 : index
    %0 = vector.load %arg2[%c0, %c0_0] : memref<8x512xf32, #tpu.memory_space<vmem>>, vector<8x512xf32>
    %c0_1 = arith.constant 0 : index
    %c0_2 = arith.constant 0 : index
    %1 = vector.load %arg1[%c0_1, %c0_2] : memref<1x512xf32, #tpu.memory_space<vmem>>, vector<1x512xf32>
    %2 = vector.broadcast %1 : vector<1x512xf32> to vector<8x512xf32>
    %3 = arith.mulf %2, %0 : vector<8x512xf32>
    %4 = math.tanh %3 : vector<8x512xf32>
    %5 = arith.mulf %4, %0 : vector<8x512xf32>
    %c0_3 = arith.constant 0 : index
    %c0_4 = arith.constant 0 : index
    %6 = vector.load %arg3[%c0_3, %c0_4] : memref<8x512xf32, #tpu.memory_space<vmem>>, vector<8x512xf32>
    tpu.vector_store %arg3[%c0_3, %c0_4], %5 {strides = array<i32>} : memref<8x512xf32, #tpu.memory_space<vmem>>, vector<8x512xf32>,
    return
  }
  func.func @transform_0(%arg0: i32) -> (i32, i32) {
    %c0_i32 = arith.constant 0 : i32
    %c0_i32_0 = arith.constant 0 : i32
    %c0_i32_1 = arith.constant 0 : i32
    return %c0_i32, %c0_i32_0 : i32, i32
  }
  func.func @transform_1(%arg0: i32) -> (i32, i32) {
    %c0_i32 = arith.constant 0 : i32
    %c0_i32_0 = arith.constant 0 : i32
    return %arg0, %c0_i32 : i32, i32
  }
  func.func @transform_2(%arg0: i32) -> (i32, i32) {
    %c0_i32 = arith.constant 0 : i32
    %c0_i32_0 = arith.constant 0 : i32
    return %arg0, %c0_i32 : i32, i32
  }
}

</mosaic_0001>

<llo_original>
// kernel: tpu_custom_call.1
$region0: #{tpu_custom_call.1}
  #allocation0 [shape = 'u32[]', space=smem, size = 0x4, offset = 0x4, fixed_abs, tag = 'smem constant byte address 0x4 - core index']
  #allocation1 [shape = 'u32[144,128]{1,0:T(1,128)}', space=vmem, size = 0x12000, scoped, tag = 'internal scratch']
  %s0 = inlined_call_operand.hbm [shape: f32[1,512], index: 0, kind: input, shape index: {}]
  %s1 = inlined_call_operand.hbm [shape: f32[8,512], index: 1, kind: input, shape index: {}]
  %s2 = inlined_call_operand.hbm [shape: f32[8,512], index: 2, kind: output, shape index: {}]
  %s3 = sld [smem:[#allocation0]]
  $region26: #{tpu_custom_call.1} parent=0
    _
  %s5 = ssub.s32 1, %s3
  %s6 = scalar_select 0, %s5, %s3
  $region1: #{tpu_custom_call.1} parent=0
    #allocation2 [shape = 'u8[2048]{0}', space=vmem, size = 0x800, scoped, tag = 'input window, operand 0, single buffered']
    #allocation3 [shape = 's32[1]{0}', space=sflag, size = 0x4, scoped, tag = 'scoped memory for tpu_custom_call.1']
    #allocation4 [shape = 's32[1]{0}', space=sflag, size = 0x4, scoped, tag = 'scoped memory for tpu_custom_call.1']
    #allocation5 [shape = 'u8[16384]{0}', space=vmem, size = 0x4000, scoped, tag = 'input window, operand 1, single buffered']
    #allocation6 [shape = 's32[1]{0}', space=sflag, size = 0x4, scoped, tag = 'scoped memory for tpu_custom_call.1']
    #allocation7 [shape = 'u8[16384]{0}', space=vmem, size = 0x4000, scoped, tag = 'output window, operand 0, single buffered']
    %7 = vsyncpa [#allocation3], 0
    %8 = vsyncpa [#allocation6], 0
    %9 = vsyncpa [#allocation4], 0
    // Predicated region
    $region2: #{tpu_custom_call.1} parent=1 // pred_check
      _
    $region3: #{tpu_custom_call.1} parent=1 // pred_check_branch
      %11 = sbr.rel (0) target = $region5
    $region4: #{tpu_custom_call.1} parent=1 // pred_region
      %s13 = ssub.s32 64, 64
      %14 = vsyncadd [#allocation3], %s13
      %s16 = sshll.u32 [#allocation2], 4
      %s17 = int_to_ptr.vmem [resolvable:$true] %s16
      %19 = dma.hbm_to_vmem [thread:$0]  %s0, 64, %s17, [#allocation3]
    $region5: #{tpu_custom_call.1} parent=1 // pred_fallthru
      _
    // Predicated region
    $region6: #{tpu_custom_call.1} parent=1 // pred_check
      _
    $region7: #{tpu_custom_call.1} parent=1 // pred_check_branch
      %21 = sbr.rel (0) target = $region9
    $region8: #{tpu_custom_call.1} parent=1 // pred_region
      %s23 = ssub.s32 512, 512
      %24 = vsyncadd [#allocation6], %s23
      %s26 = sshll.u32 [#allocation5], 4
      %s27 = int_to_ptr.vmem [resolvable:$true] %s26
      %29 = dma.hbm_to_vmem [thread:$0]  %s1, 512, %s27, [#allocation6]
    $region9: #{tpu_custom_call.1} parent=1 // pred_fallthru
      _
    // Predicated region
    $region10: #{tpu_custom_call.1} parent=1 // pred_check
      _
    $region11: #{tpu_custom_call.1} parent=1 // pred_check_branch
      %31 = sbr.rel (0) target = $region13
    $region12: #{tpu_custom_call.1} parent=1 // pred_region
      %32 = dma.done [#allocation3], 64
    $region13: #{tpu_custom_call.1} parent=1 // pred_fallthru
      _
    // Predicated region
    $region14: #{tpu_custom_call.1} parent=1 // pred_check
      _
    $region15: #{tpu_custom_call.1} parent=1 // pred_check_branch
      %34 = sbr.rel (0) target = $region17
    $region16: #{tpu_custom_call.1} parent=1 // pred_region
      %35 = dma.done [#allocation6], 512
    $region17: #{tpu_custom_call.1} parent=1 // pred_fallthru
      _
    %v36 = vld [vmem:[#allocation5] sm:$0xff]
    %v37 = vld [vmem:[#allocation5 + $0x8] sm:$0xff]
    %v38 = vld [vmem:[#allocation5 + $0x10] sm:$0xff]
    %v39 = vld [vmem:[#allocation5 + $0x18] sm:$0xff]
    %v40 = vld [vmem:[#allocation2] sm:$0xf]
    %v42 = vlaneseq
    %v43 = vshrl.u32 %v42, 7
    %v44 = vsub.s32 0, %v43
    %v45 = vrot.slane %v40, %v44
    %v46 = vlaneseq
    %v47 = vshrl.u32 %v46, 7
    %v48 = vsub.s32 1, %v47
    %v49 = vrot.slane %v40, %v48
    %v50 = vlaneseq
    %v51 = vshrl.u32 %v50, 7
    %v52 = vsub.s32 2, %v51
    %v53 = vrot.slane %v40, %v52
    %v54 = vlaneseq
    %v55 = vshrl.u32 %v54, 7
    %v56 = vsub.s32 3, %v55
    %v57 = vrot.slane %v40, %v56
    %v62 = vmul.f32 %v45, %v36
    %v63 = vmul.f32 %v49, %v37
    %v64 = vmul.f32 %v53, %v38
    %v65 = vmul.f32 %v57, %v39
    %v66 = vtanh.pop %v62
    %v67 = vtanh.pop %v63
    %v68 = vtanh.pop %v64
    %v69 = vtanh.pop %v65
    %v70 = vmul.f32 %v66, %v36
    %v71 = vmul.f32 %v67, %v37
    %v72 = vmul.f32 %v68, %v38
    %v73 = vmul.f32 %v69, %v39
    %74 = vst [vmem:[#allocation7] sm:$0xff] %v70
    %75 = vst [vmem:[#allocation7 + $0x8] sm:$0xff] %v71
    %76 = vst [vmem:[#allocation7 + $0x10] sm:$0xff] %v72
    %77 = vst [vmem:[#allocation7 + $0x18] sm:$0xff] %v73
    // Predicated region
    $region18: #{tpu_custom_call.1} parent=1 // pred_check
      _
    $region19: #{tpu_custom_call.1} parent=1 // pred_check_branch
      %79 = sbr.rel (0) target = $region21
    $region20: #{tpu_custom_call.1} parent=1 // pred_region
      %s81 = ssub.s32 512, 512
      %82 = vsyncadd [#allocation4], %s81
      %s84 = sshll.u32 [#allocation7], 4
      %s85 = int_to_ptr.vmem [resolvable:$true] %s84
      %87 = dma.vmem_to_hbm [thread:$0]  %s85, 512, %s2, [#allocation4]
    $region21: #{tpu_custom_call.1} parent=1 // pred_fallthru
      _
    // Predicated region
    $region22: #{tpu_custom_call.1} parent=1 // pred_check
      _
    $region23: #{tpu_custom_call.1} parent=1 // pred_check_branch
      %89 = sbr.rel (0) target = $region25
    $region24: #{tpu_custom_call.1} parent=1 // pred_region
      %90 = dma.done [#allocation4], 512
    $region25: #{tpu_custom_call.1} parent=1 // pred_fallthru
      _
    %91 = vsyncpa [#allocation3], 1
    %92 = vsyncpa [#allocation6], 1
    %93 = vsyncpa [#allocation4], 1

</llo_original>
